<compile_context>
chip_gen: v7x
topology: tpu7x:2x2x1
jax: 0.10.0
libtpu: 0.0.40
codegen_flags: <defaults>
</compile_context>

<pallas_src>
import math

import jax
import jax.numpy as jnp
from jax.experimental import pallas as pl
from jax.experimental.pallas import tpu as pltpu


# ----------------------------------------------------------------------------
# Fused kernel:  out[r, v] = sum_d (x[r, d] + pos[r, d]) * w[d, v] + bias[v]
# ----------------------------------------------------------------------------
def fused_pos_fc_kernel(x_ref, pos_ref, w_ref, b_ref, o_ref):
    # x_ref:   (tile_r, D)      bf16
    # pos_ref: (tile_r, D)      bf16   (precomputed sin/cos table + alpha)
    # w_ref:   (D, tile_v)      bf16   (resident across row tiles)
    # b_ref:   (1, tile_v)      f32
    # o_ref:   (tile_r, tile_v) bf16
    lhs = x_ref[...] + pos_ref[...]          # bf16 VPU add, filler under the MXU
    acc = jnp.dot(lhs, w_ref[...], preferred_element_type=jnp.float32)
    o_ref[...] = (acc + b_ref[...]).astype(o_ref.dtype)


def _vmem_capacity_bytes():
    try:
        return int(pltpu.get_tpu_info().vmem_capacity_bytes)
    except Exception:
        return 64 << 20  # conservative (v7x per-TensorCore)


def fused_pos_fc(x_rows, pos_rows, w, b, *, tile_r=None, tile_v=None):
    # x_rows: (R, D) bf16, pos_rows: (R, D) bf16, w: (D, V) bf16, b: (1, V) f32
    # returns (R, V) bf16
    R, D = x_rows.shape
    V = w.shape[1]

    vmem_cap = _vmem_capacity_bytes()
    if vmem_cap >= (100 << 20):          # v5e / v6e: 128 MiB physical VMEM
        def_tr, def_tv, cap = 512, 2048, 96 << 20
    else:                                # v7x: 64 MiB per TensorCore
        def_tr, def_tv, cap = 256, 1024, 48 << 20
    if tile_r is None:
        tile_r = min(def_tr, R)
    if tile_v is None:
        tile_v = min(def_tv, V)

    # Vocab axis OUTERMOST -> weight tile resident across all row tiles.
    grid = (pl.cdiv(V, tile_v), pl.cdiv(R, tile_r))

    # Explicit VMEM budget: double-buffered x, pos, w, bias, out tiles (bf16/f32).
    est = 2 * (tile_r * D * 2 + tile_r * D * 2
               + D * tile_v * 2 + tile_v * 4 + tile_r * tile_v * 2)
    vmem_limit = int(min(max(2 * est, 16 << 20), cap))

    return pl.pallas_call(
        fused_pos_fc_kernel,
        out_shape=jax.ShapeDtypeStruct((R, V), jnp.bfloat16),
        grid=grid,
        in_specs=[
            pl.BlockSpec((tile_r, D), lambda vj, ri: (ri, 0)),
            pl.BlockSpec((tile_r, D), lambda vj, ri: (ri, 0)),
            pl.BlockSpec((D, tile_v), lambda vj, ri: (0, vj)),   # leading-axis only
            pl.BlockSpec((1, tile_v), lambda vj, ri: (0, vj)),
        ],
        out_specs=pl.BlockSpec((tile_r, tile_v), lambda vj, ri: (ri, vj)),
        compiler_params=pltpu.CompilerParams(
            dimension_semantics=("parallel", "parallel"),
            vmem_limit_bytes=vmem_limit),
    )(x_rows, pos_rows, w, b)


# ----------------------------------------------------------------------------
# Rotary-style positional table (computed once; depends only on S and D)
# ----------------------------------------------------------------------------
def make_pos_embed(freq, alpha, S):
    # freq, alpha: (1, D//2) -> table: (S, D) f32
    pos = jnp.arange(S, dtype=jnp.float32)[:, None]                       # (S, 1)
    angles = pos * freq                                                   # (S, D//2)
    # TODO(synk): PyTorch adds alpha of shape (1,1,D//2) to a (..,D) tensor (the
    # broadcast is malformed); alpha is zero-initialized, so we tile it to
    # width D to keep the math identical.
    alpha_full = jnp.concatenate([alpha, alpha], axis=-1)                 # (1, D)
    table = jnp.concatenate([jnp.sin(angles), jnp.cos(angles)], axis=-1)  # (S, D)
    return table + alpha_full


# ----------------------------------------------------------------------------
# Model wrapper
# ----------------------------------------------------------------------------
def init_params(key, vocab_size, d_model):
    k_emb, k_w, k_b = jax.random.split(key, 3)
    # nn.Embedding default: N(0, 1); stored bf16 to halve activation streaming.
    emb_table = jax.random.normal(
        k_emb, (vocab_size, d_model), jnp.float32).astype(jnp.bfloat16)
    # nn.Linear default: U(-1/sqrt(D), 1/sqrt(D)); weights bf16 for the MXU and
    # to halve weight-streaming HBM traffic (f32 accumulation in-kernel).
    bound = 1.0 / math.sqrt(d_model)
    fc_w = jax.random.uniform(k_w, (d_model, vocab_size), jnp.float32,
                              minval=-bound, maxval=bound).astype(jnp.bfloat16)
    fc_b = jax.random.uniform(k_b, (1, vocab_size), jnp.float32,
                              minval=-bound, maxval=bound)
    # RotaryPositionalEmbedding params
    alpha = jnp.zeros((1, d_model // 2), jnp.float32)
    freq = jnp.exp(
        jnp.arange(0, d_model, 2, dtype=jnp.float32)
        * -(math.log(10000.0) / d_model)).reshape(1, d_model // 2)
    return dict(emb_table=emb_table, fc_w=fc_w, fc_b=fc_b,
                alpha=alpha, freq=freq)


def gpt2_with_changes_forward(params, token_ids, mask=None):
    B, S = token_ids.shape
    D = params["emb_table"].shape[1]
    V = params["fc_w"].shape[1]

    # Embedding lookup (gather) — plain-JAX glue; rows flattened to (B*S, D).
    x_rows = params["emb_table"][token_ids.reshape(-1)]            # (B*S, D) bf16

    # Positional table computed once (batch-independent), tiled to the flat
    # row axis so the kernel's pos tile lines up with the x tile.
    pos = make_pos_embed(params["freq"], params["alpha"], S)       # (S, D) f32
    pos_rows = jnp.tile(pos.astype(jnp.bfloat16), (B, 1))          # (B*S, D) bf16

    # TODO(synk): the PyTorch layer stack (GroupQueryAttention,
    # SlidingWindowAttention, TransformerBlock) has undefined forward bodies /
    # an undefined class, so it is skipped rather than faked.

    # Fused (x + pos_embed) @ W + b  — single weight-resident Pallas kernel.
    out_rows = fused_pos_fc(x_rows, pos_rows, params["fc_w"], params["fc_b"])
    return out_rows.reshape(B, S, V)


if __name__ == "__main__":
    VOCAB = 128
    D_MODEL = 32
    B, S = 2, 8

    key = jax.random.PRNGKey(0)
    k_params, k_tok = jax.random.split(key)
    params = init_params(k_params, VOCAB, D_MODEL)
    token_ids = jax.random.randint(k_tok, (B, S), 0, VOCAB, dtype=jnp.int32)
    mask = jnp.ones((S, S), jnp.float32)  # unused (layer stack undefined)

    out = gpt2_with_changes_forward(params, token_ids, mask)
    out = jax.block_until_ready(out)
    assert out.shape == (B, S, VOCAB), out.shape
    assert out.dtype == jnp.bfloat16, out.dtype
    assert bool(jnp.all(jnp.isfinite(out.astype(jnp.float32))))
    print("KERNEL_OK")
</pallas_src>

<mosaic_0001>
module attributes {stable_mosaic.version = 11 : i64} {
  func.func @fused_pos_fc_kernel(%arg0: i32, %arg1: i32, %arg2: memref<16x32xbf16, #tpu.memory_space<vmem>>, %arg3: memref<16x32xbf16, #tpu.memory_space<vmem>>, %arg4: memref<32x128xbf16, #tpu.memory_space<vmem>>, %arg5: memref<1x128xf32, #tpu.memory_space<vmem>>, %arg6: memref<16x128xbf16, #tpu.memory_space<vmem>>) attributes {dimension_semantics = [#tpu.dimension_semantics<parallel>, #tpu.dimension_semantics<parallel>], iteration_bounds = array<i64: 1, 1>, scalar_prefetch = 0 : i64, scratch_operands = 0 : i64, tpu.core_type = #tpu.core_type<tc>, window_params = [{transform_indices = @transform_0, window_bounds = array<i64: 16, 32>}, {transform_indices = @transform_1, window_bounds = array<i64: 16, 32>}, {transform_indices = @transform_2, window_bounds = array<i64: 32, 128>}, {transform_indices = @transform_3, window_bounds = array<i64: 1, 128>}, {transform_indices = @transform_4, window_bounds = array<i64: 16, 128>}]} {
    %c0 = arith.constant 0 : index
    %c0_0 = arith.constant 0 : index
    %0 = vector.load %arg2[%c0, %c0_0] : memref<16x32xbf16, #tpu.memory_space<vmem>>, vector<16x32xbf16>
    %c0_1 = arith.constant 0 : index
    %c0_2 = arith.constant 0 : index
    %1 = vector.load %arg3[%c0_1, %c0_2] : memref<16x32xbf16, #tpu.memory_space<vmem>>, vector<16x32xbf16>
    %2 = arith.addf %0, %1 : vector<16x32xbf16>
    %c0_3 = arith.constant 0 : index
    %c0_4 = arith.constant 0 : index
    %3 = vector.load %arg4[%c0_3, %c0_4] : memref<32x128xbf16, #tpu.memory_space<vmem>>, vector<32x128xbf16>
    %cst = arith.constant dense<0.000000e+00> : vector<16x128xf32>
    %4 = tpu.matmul %2, %3, %cst {dimension_numbers = #tpu.dot_dimension_numbers<[1], [0], [0], [1], [0, 0, 1, 1], [], []>} : vector<16x32xbf16>, vector<32x128xbf16>, vector<16x128xf32> -> vector<16x128xf32>
    %c0_5 = arith.constant 0 : index
    %c0_6 = arith.constant 0 : index
    %5 = vector.load %arg5[%c0_5, %c0_6] : memref<1x128xf32, #tpu.memory_space<vmem>>, vector<1x128xf32>
    %6 = vector.broadcast %5 : vector<1x128xf32> to vector<16x128xf32>
    %7 = arith.addf %4, %6 : vector<16x128xf32>
    %8 = arith.truncf %7 : vector<16x128xf32> to vector<16x128xbf16>
    %c0_7 = arith.constant 0 : index
    %c0_8 = arith.constant 0 : index
    %9 = vector.load %arg6[%c0_7, %c0_8] : memref<16x128xbf16, #tpu.memory_space<vmem>>, vector<16x128xbf16>
    tpu.vector_store %arg6[%c0_7, %c0_8], %8 {strides = array<i32>} : memref<16x128xbf16, #tpu.memory_space<vmem>>, vector<16x128xbf16>,
    return
  }
  func.func @transform_0(%arg0: i32, %arg1: i32) -> (i32, i32) {
    %c0_i32 = arith.constant 0 : i32
    %c0_i32_0 = arith.constant 0 : i32
    return %arg1, %c0_i32 : i32, i32
  }
  func.func @transform_1(%arg0: i32, %arg1: i32) -> (i32, i32) {
    %c0_i32 = arith.constant 0 : i32
    %c0_i32_0 = arith.constant 0 : i32
    return %arg1, %c0_i32 : i32, i32
  }
  func.func @transform_2(%arg0: i32, %arg1: i32) -> (i32, i32) {
    %c0_i32 = arith.constant 0 : i32
    %c0_i32_0 = arith.constant 0 : i32
    return %c0_i32, %arg0 : i32, i32
  }
  func.func @transform_3(%arg0: i32, %arg1: i32) -> (i32, i32) {
    %c0_i32 = arith.constant 0 : i32
    %c0_i32_0 = arith.constant 0 : i32
    return %c0_i32, %arg0 : i32, i32
  }
  func.func @transform_4(%arg0: i32, %arg1: i32) -> (i32, i32) {
    %c0_i32 = arith.constant 0 : i32
    return %arg1, %arg0 : i32, i32
  }
}

</mosaic_0001>

<llo_original>
// kernel: tpu_custom_call.1
$region0: #{tpu_custom_call.1}
  #allocation0 [shape = 'u32[]', space=smem, size = 0x4, offset = 0x4, fixed_abs, tag = 'smem constant byte address 0x4 - core index']
  #allocation1 [shape = 'u32[144,128]{1,0:T(1,128)}', space=vmem, size = 0x12000, scoped, tag = 'internal scratch']
  %s0 = inlined_call_operand.hbm [shape: bf16[16,32], index: 0, kind: input, shape index: {}]
  %s1 = inlined_call_operand.hbm [shape: bf16[16,32], index: 1, kind: input, shape index: {}]
  %s2 = inlined_call_operand.hbm [shape: bf16[32,128], index: 2, kind: input, shape index: {}]
  %s3 = inlined_call_operand.vmem [shape: f32[1,128], index: 3, kind: input, shape index: {}]
  %s4 = inlined_call_operand.hbm [shape: bf16[16,128], index: 4, kind: output, shape index: {}]
  %s5 = sld [smem:[#allocation0]]
  $region38: #{tpu_custom_call.1} parent=0
    _
  %s7 = ssub.s32 1, %s5
  %s8 = scalar_select 0, %s7, %s5
  $region1: #{tpu_custom_call.1} parent=0
    #allocation2 [shape = 'u8[4096]{0}', space=vmem, size = 0x1000, scoped, tag = 'input window, operand 0, single buffered']
    #allocation3 [shape = 's32[1]{0}', space=sflag, size = 0x4, scoped, tag = 'scoped memory for tpu_custom_call.1']
    #allocation4 [shape = 's32[1]{0}', space=sflag, size = 0x4, scoped, tag = 'scoped memory for tpu_custom_call.1']
    #allocation5 [shape = 'u8[4096]{0}', space=vmem, size = 0x1000, scoped, tag = 'input window, operand 1, single buffered']
    #allocation6 [shape = 's32[1]{0}', space=sflag, size = 0x4, scoped, tag = 'scoped memory for tpu_custom_call.1']
    #allocation7 [shape = 'u8[8192]{0}', space=vmem, size = 0x2000, scoped, tag = 'input window, operand 2, single buffered']
    #allocation8 [shape = 'u8[4096]{0}', space=vmem, size = 0x1000, scoped, tag = 'output window, operand 0, single buffered']
    %9 = vsyncpa [#allocation3], 0
    %10 = vsyncpa [#allocation6], 0
    %11 = vsyncpa [#allocation4], 0
    // Predicated region
    $region2: #{tpu_custom_call.1} parent=1 // pred_check
      _
    $region3: #{tpu_custom_call.1} parent=1 // pred_check_branch
      %13 = sbr.rel (0) target = $region5
    $region4: #{tpu_custom_call.1} parent=1 // pred_region
      %s15 = ssub.s32 128, 128
      %16 = vsyncadd [#allocation3], %s15
      %s17 = sshll.u32 [#allocation2], 4
      %s18 = int_to_ptr.vmem [resolvable:$true] %s17
      %23 = dma.hbm_to_vmem [thread:$0]  %s0, 128, %s18, [#allocation3], 64, 64, 4
    $region5: #{tpu_custom_call.1} parent=1 // pred_fallthru
      _
    // Predicated region
    $region6: #{tpu_custom_call.1} parent=1 // pred_check
      _
    $region7: #{tpu_custom_call.1} parent=1 // pred_check_branch
      %25 = sbr.rel (0) target = $region9
    $region8: #{tpu_custom_call.1} parent=1 // pred_region
      %s27 = ssub.s32 128, 128
      %28 = vsyncadd [#allocation6], %s27
      %s29 = sshll.u32 [#allocation5], 4
      %s30 = int_to_ptr.vmem [resolvable:$true] %s29
      %35 = dma.hbm_to_vmem [thread:$0]  %s1, 128, %s30, [#allocation6], 64, 64, 4
    $region9: #{tpu_custom_call.1} parent=1 // pred_fallthru
      _
    // Predicated region
    $region10: #{tpu_custom_call.1} parent=1 // pred_check
      _
    $region11: #{tpu_custom_call.1} parent=1 // pred_check_branch
      %37 = sbr.rel (0) target = $region13
    $region12: #{tpu_custom_call.1} parent=1 // pred_region
      %s39 = ssub.s32 256, 256
      %40 = vsyncadd [#allocation6], %s39
      %s41 = sshll.u32 [#allocation7], 4
      %s42 = int_to_ptr.vmem [resolvable:$true] %s41
      %47 = dma.hbm_to_vmem [thread:$0]  %s2, 256, %s42, [#allocation6], 64, 64, 4
    $region13: #{tpu_custom_call.1} parent=1 // pred_fallthru
      _
    // Predicated region
    $region14: #{tpu_custom_call.1} parent=1 // pred_check
      _
    $region15: #{tpu_custom_call.1} parent=1 // pred_check_branch
      %49 = sbr.rel (0) target = $region17
    $region16: #{tpu_custom_call.1} parent=1 // pred_region
      _
    $region17: #{tpu_custom_call.1} parent=1 // pred_fallthru
      _
    // Predicated region
    $region18: #{tpu_custom_call.1} parent=1 // pred_check
      _
    $region19: #{tpu_custom_call.1} parent=1 // pred_check_branch
      %51 = sbr.rel (0) target = $region21
    $region20: #{tpu_custom_call.1} parent=1 // pred_region
      %52 = dma.done [#allocation3], 128
    $region21: #{tpu_custom_call.1} parent=1 // pred_fallthru
      _
    // Predicated region
    $region22: #{tpu_custom_call.1} parent=1 // pred_check
      _
    $region23: #{tpu_custom_call.1} parent=1 // pred_check_branch
      %54 = sbr.rel (0) target = $region25
    $region24: #{tpu_custom_call.1} parent=1 // pred_region
      %55 = dma.done [#allocation6], 128
    $region25: #{tpu_custom_call.1} parent=1 // pred_fallthru
      _
    // Predicated region
    $region26: #{tpu_custom_call.1} parent=1 // pred_check
      _
    $region27: #{tpu_custom_call.1} parent=1 // pred_check_branch
      %57 = sbr.rel (0) target = $region29
    $region28: #{tpu_custom_call.1} parent=1 // pred_region
      %58 = dma.done [#allocation6], 256
    $region29: #{tpu_custom_call.1} parent=1 // pred_fallthru
      _
    %v60 = vld [vmem:[#allocation2] sm:$0xf]
    %v61 = vld [vmem:[#allocation2 + $0x4] sm:$0xf]
    %v62 = vld [vmem:[#allocation5] sm:$0xf]
    %v63 = vld [vmem:[#allocation5 + $0x4] sm:$0xf]
    %v64 = vadd.bf16 %v60, %v62
    %v65 = vadd.bf16 %v61, %v63
    %v66 = vld [vmem:[#allocation7] sm:$0xf]
    %v67 = vld [vmem:[#allocation7 + $0x4] sm:$0xf]
    %v68 = vld [vmem:[#allocation7 + $0x8] sm:$0xf]
    %v69 = vld [vmem:[#allocation7 + $0xc] sm:$0xf]
    %v70 = vld [vmem:[%s3] sm:$0x1]
    %v72 = vlaneseq
    %v73 = vshrl.u32 %v72, 7
    %v74 = vsub.s32 0, %v73
    %v75 = vrot.slane %v70, %v74
    %v79 = vunpack.c.l.b16 %v64
    %v80 = vunpack.c.l.b16 %v65
    %v81 = vpack.c.b16 %v80, %v79
    %v86 = vunpack.c.l.b16 %v66
    %v87 = vunpack.c.l.b16 %v67
    %v88 = vunpack.c.l.b16 %v68
    %v89 = vunpack.c.l.b16 %v69
    %v90 = vpack.c.b16 %v87, %v86
    %v91 = vpack.c.b16 %v89, %v88
    %vm94 = vcmask 261120
    %v96 = vsel %vm94, %v81, 0
    %98 = vmatprep.subr.bf16.mxu0 0
    %99 = vmatpush1.bf16.msra.mxu0 %v90
    %100 = vmatprep.subr.bf16.mxu0 0
    %101 = vmatpush1.bf16.msra.mxu0 %v91
    %102 = vmatprep.subr.bf16.mxu0 0
    %103 = vmatpush1.bf16.msra.mxu0 0
    %104 = vmatprep.subr.bf16.mxu0 0
    %105 = vmatpush1.bf16.msra.mxu0 0
    %106 = vmatprep.subr.bf16.mxu0 0
    %107 = vmatpush1.bf16.msra.mxu0 0
    %108 = vmatprep.subr.bf16.mxu0 0
    %109 = vmatpush1.bf16.msra.mxu0 0
    %110 = vmatprep.subr.bf16.mxu0 0
    %111 = vmatpush1.bf16.msra.mxu0 0
    %112 = vmatprep.subr.bf16.mxu0 0
    %113 = vmatpush1.bf16.msra.mxu0 0
    %114 = vmatprep.subr.bf16.mxu0 0
    %115 = vmatpush1.bf16.msra.mxu0 0
    %116 = vmatprep.subr.bf16.mxu0 0
    %117 = vmatpush1.bf16.msra.mxu0 0
    %118 = vmatprep.subr.bf16.mxu0 0
    %119 = vmatpush1.bf16.msra.mxu0 0
    %120 = vmatprep.subr.bf16.mxu0 0
    %121 = vmatpush1.bf16.msra.mxu0 0
    %122 = vmatprep.subr.bf16.mxu0 0
    %123 = vmatpush1.bf16.msra.mxu0 0
    %124 = vmatprep.subr.bf16.mxu0 0
    %125 = vmatpush1.bf16.msra.mxu0 0
    %126 = vmatprep.subr.bf16.mxu0 0
    %127 = vmatpush1.bf16.msra.mxu0 0
    %128 = vmatprep.subr.bf16.mxu0 0
    %129 = vmatpush1.bf16.msra.mxu0 0
    %130 = vmatprep.mubr.bf16.mxu0 0
    %131 = vmatmul.mubr.bf16.gmra.mrb[0].mxu0 %v96
    %v132 = vpop.f32.mrb[0].mxu0
    %v133 = vadd.f32 %v75, %v132
    %v134 = vpop.f32.mrb[0].mxu0
    %v135 = vpop.f32.mrb[0].mxu0
    %v136 = vadd.f32 %v75, %v135
    %v137 = vpop.f32.mrb[0].mxu0
    %138 = vdwg.mxu0
    %v139 = vpack.c.bf16 %v136, %v133
    %v141 = vunpack.c.l.b16 %v139
    %v142 = vunpack.c.h.b16 %v139
    %v143 = vpack.c.b16 %v141, %v141
    %v144 = vpack.c.b16 %v142, %v142
    %147 = vst [vmem:[#allocation8] sm:$0xf] %v143
    %148 = vst [vmem:[#allocation8 + $0x4] sm:$0xf] %v144
    // Predicated region
    $region30: #{tpu_custom_call.1} parent=1 // pred_check
      _
    $region31: #{tpu_custom_call.1} parent=1 // pred_check_branch
      %150 = sbr.rel (0) target = $region33
    $region32: #{tpu_custom_call.1} parent=1 // pred_region
      %s152 = ssub.s32 128, 128
      %153 = vsyncadd [#allocation4], %s152
      %s154 = sshll.u32 [#allocation8], 4
      %s155 = int_to_ptr.vmem [resolvable:$true] %s154
      %160 = dma.vmem_to_hbm [thread:$0]  %s155, 128, %s4, [#allocation4], 64, 64, 4
    $region33: #{tpu_custom_call.1} parent=1 // pred_fallthru
      _
    // Predicated region
    $region34: #{tpu_custom_call.1} parent=1 // pred_check
      _
    $region35: #{tpu_custom_call.1} parent=1 // pred_check_branch
      %162 = sbr.rel (0) target = $region37
    $region36: #{tpu_custom_call.1} parent=1 // pred_region
      %163 = dma.done [#allocation4], 128
    $region37: #{tpu_custom_call.1} parent=1 // pred_fallthru
      _
    %164 = vsyncpa [#allocation3], 1
    %165 = vsyncpa [#allocation6], 1
    %166 = vsyncpa [#allocation4], 1

</llo_original>
